<compile_context>
chip_gen: v6e
topology: v6e:2x2x1
jax: 0.10.0
libtpu: 0.0.40
codegen_flags: <defaults>
</compile_context>

<pallas_src>
import functools

import jax
import jax.numpy as jnp
from jax import lax
from jax.experimental import pallas as pl
from jax.experimental.pallas import tpu as pltpu

EXPANSION = 4
BN_EPS = 1e-5
LANES = 128                      # vreg lane width; channel dims padded to this
VMEM_LIMIT = 48 * 1024 * 1024    # leaves headroom inside v7x's 64 MiB VMEM


# --------------------------- small helpers ----------------------------------
def _round_up(n, m):
    return ((n + m - 1) // m) * m


def _pad_last(a, new):
    pad = [(0, 0)] * a.ndim
    pad[-1] = (0, new - a.shape[-1])
    return jnp.pad(a, pad)


def _pad2d(w, rows, cols):
    return jnp.pad(w, ((0, rows - w.shape[0]), (0, cols - w.shape[1])))


def _img_spec(shape):
    """One batch element per grid step, full spatial x channel block."""
    return pl.BlockSpec((1,) + tuple(shape[1:]), lambda i: (i, 0, 0, 0))


def _full_spec(shape):
    """Whole (small) array resident in VMEM across the grid."""
    nd = len(shape)
    return pl.BlockSpec(tuple(shape), lambda i: (0,) * nd)


def _stats_spec(C):
    """Per-image [sum; sumsq] stats block: (1, 2, C) indexed by batch."""
    return pl.BlockSpec((1, 2, C), lambda i: (i, 0, 0))


def _downsample_nhwc(x, stride):
    """Spatial stride on a (1, H, W, C) value; avoids strided slices when even."""
    if stride == 1:
        return x
    _, H, W, C = x.shape
    Ho = (H - 1) // stride + 1
    Wo = (W - 1) // stride + 1
    if H == stride * Ho and W == stride * Wo:
        return x.reshape(1, Ho, stride, Wo, stride, C)[:, :, 0, :, 0, :]
    return lax.slice(x, (0, 0, 0, 0),
                     (1, stride * (Ho - 1) + 1, stride * (Wo - 1) + 1, C),
                     (1, stride, stride, 1))


def _conv_tap(padded, kh, kw, Ho, Wo, stride):
    """Tap (kh, kw) of a 3x3/stride-s conv from a (H+2, W+2, C) padded value."""
    Hp, Wp, C = padded.shape
    if stride == 1:
        return padded[kh:kh + Ho, kw:kw + Wo, :]
    if kh + stride * Ho <= Hp and kw + stride * Wo <= Wp:
        blk = padded[kh:kh + stride * Ho, kw:kw + stride * Wo, :]
        return blk.reshape(Ho, stride, Wo, stride, C)[:, 0, :, 0, :]
    # TODO(synk): odd spatial sizes with stride>1 fall back to a strided slice.
    return lax.slice(padded, (kh, kw, 0),
                     (kh + stride * (Ho - 1) + 1, kw + stride * (Wo - 1) + 1, C),
                     (stride, stride, 1))


def _img_stats(h):
    """Per-image per-channel [sum; sum_of_squares] (f32): (rows, C) -> (1,2,C)."""
    s = jnp.sum(h, axis=0, keepdims=True)
    s2 = jnp.sum(h * h, axis=0, keepdims=True)
    return jnp.concatenate([s, s2], axis=0).reshape(1, 2, h.shape[1])


# ------------------------------- kernels -------------------------------------
def stage1_kernel(*refs, stride, has_proj):
    """conv1 (1x1) and (optionally) the projection shortcut conv, plus stats."""
    if has_proj:
        x_ref, w1_ref, ws_ref, h1_ref, sc_ref, st1_ref, stsc_ref = refs
    else:
        x_ref, w1_ref, h1_ref, st1_ref = refs
    _, H, W, Cinp = x_ref.shape
    Pp = w1_ref.shape[1]

    x = x_ref[...]                                          # (1,H,W,Cinp) bf16
    h1 = jnp.dot(x.reshape(H * W, Cinp), w1_ref[...],
                 preferred_element_type=jnp.float32)        # (H*W, Pp) f32
    h1_ref[...] = h1.reshape(1, H, W, Pp)
    st1_ref[...] = _img_stats(h1)

    if has_proj:
        Cp = ws_ref.shape[1]
        Ho = (H - 1) // stride + 1
        Wo = (W - 1) // stride + 1
        xs = _downsample_nhwc(x, stride)
        sc = jnp.dot(xs.reshape(Ho * Wo, Cinp), ws_ref[...],
                     preferred_element_type=jnp.float32)
        sc_ref[...] = sc.reshape(1, Ho, Wo, Cp)
        stsc_ref[...] = _img_stats(sc)


def stage2_kernel(h1_ref, s1_ref, t1_ref, w2_ref, h2_ref, st2_ref, pad_ref, *,
                  stride):
    """bn1 + relu, then the 3x3 stride-s conv as ONE im2col matmul (K=9*Pp)."""
    _, H, W, Pp = h1_ref.shape
    Ho = (H - 1) // stride + 1
    Wo = (W - 1) // stride + 1

    # bn1 + relu in f32, cast to bf16 for the MXU.
    a1 = jnp.maximum(h1_ref[...].reshape(H * W, Pp) * s1_ref[...] + t1_ref[...],
                     0.0).astype(jnp.bfloat16).reshape(H, W, Pp)

    # Pad scratch: zero only the halo, then write the interior.
    zrow = jnp.zeros((1, W + 2, Pp), jnp.bfloat16)
    zcol = jnp.zeros((H, 1, Pp), jnp.bfloat16)
    pad_ref[0:1, :, :] = zrow
    pad_ref[H + 1:H + 2, :, :] = zrow
    pad_ref[1:H + 1, 0:1, :] = zcol
    pad_ref[1:H + 1, W + 1:W + 2, :] = zcol
    pad_ref[1:H + 1, 1:W + 1, :] = a1
    padded = pad_ref[...]                                    # (H+2,W+2,Pp) bf16

    # im2col: 9 shifted taps concatenated along channels -> one deep matmul.
    taps = [_conv_tap(padded, kh, kw, Ho, Wo, stride).reshape(Ho * Wo, Pp)
            for kh in range(3) for kw in range(3)]
    patches = jnp.concatenate(taps, axis=1)                  # (Ho*Wo, 9*Pp)
    h2 = jnp.dot(patches, w2_ref[...], preferred_element_type=jnp.float32)
    h2_ref[...] = h2.reshape(1, Ho, Wo, Pp)
    st2_ref[...] = _img_stats(h2)


def stage3_kernel(h2_ref, s2_ref, t2_ref, w3_ref, h3_ref, st3_ref):
    """bn2 + relu, conv3 (1x1), stats."""
    _, Ho, Wo, Pp = h2_ref.shape
    Cp = w3_ref.shape[1]

    a2 = jnp.maximum(h2_ref[...].reshape(Ho * Wo, Pp) * s2_ref[...] + t2_ref[...],
                     0.0).astype(jnp.bfloat16)
    h3 = jnp.dot(a2, w3_ref[...], preferred_element_type=jnp.float32)
    h3_ref[...] = h3.reshape(1, Ho, Wo, Cp)
    st3_ref[...] = _img_stats(h3)


def stage4_kernel(*refs, has_proj):
    """bn3 + shortcut-bn (or identity) + residual add + relu (elementwise)."""
    if has_proj:
        h3_ref, s3_ref, t3_ref, sc_ref, ss_ref, ts_ref, o_ref = refs
    else:
        h3_ref, s3_ref, t3_ref, xid_ref, o_ref = refs
    _, Ho, Wo, Cp = h3_ref.shape
    main = h3_ref[...].reshape(Ho * Wo, Cp) * s3_ref[...] + t3_ref[...]
    if has_proj:
        res = sc_ref[...].reshape(Ho * Wo, Cp) * ss_ref[...] + ts_ref[...]
    else:
        res = xid_ref[...].reshape(Ho * Wo, Cp)
    o_ref[...] = jnp.maximum(main + res, 0.0).reshape(1, Ho, Wo, Cp)


# ------------------------------- wrapper --------------------------------------
def _bn_scale_shift(stats_per_img, count, gamma, beta):
    """Finalize per-image [sum; sumsq] stats into per-channel BN scale/shift."""
    st = jnp.sum(stats_per_img, axis=0)        # (2, C)
    mean = st[0:1, :] / count
    var = jnp.maximum(st[1:2, :] / count - mean * mean, 0.0)
    scale = gamma * lax.rsqrt(var + BN_EPS)
    shift = beta - mean * scale
    return scale, shift


def bottleneck_forward(x_nchw, params, stride=1):
    """Pallas bottleneck forward. Input/output are NCHW like the PyTorch module.

    NOTE: in a full NHWC network the two transposes and the channel padding
    would be done once at the network boundary rather than per block.
    """
    x = jnp.transpose(x_nchw, (0, 2, 3, 1)).astype(jnp.float32)   # NCHW -> NHWC
    N, H, W, Cin = x.shape
    P = params["w1"].shape[1]
    Cout = EXPANSION * P
    Ho = (H - 1) // stride + 1
    Wo = (W - 1) // stride + 1
    has_proj = (stride != 1) or (Cin != Cout)

    Cin_p = _round_up(Cin, LANES)
    Pp = _round_up(P, LANES)
    Cp = _round_up(Cout, LANES)

    xp = _pad_last(x, Cin_p)                    # f32, zero-padded channels
    x_bf = xp.astype(jnp.bfloat16)              # bf16 copy for the MXU

    bf, f32 = jnp.bfloat16, jnp.float32
    w1p = _pad2d(params["w1"], Cin_p, Pp).astype(bf)
    w2p = jnp.pad(params["w2"],
                  ((0, 0), (0, 0), (0, Pp - P), (0, Pp - P))).astype(bf)
    w2flat = w2p.reshape(9 * Pp, Pp)            # (kh, kw, cin)-major flattening
    w3p = _pad2d(params["w3"], Pp, Cp).astype(bf)
    g1, b1 = _pad_last(params["g1"], Pp), _pad_last(params["b1"], Pp)
    g2, b2 = _pad_last(params["g2"], Pp), _pad_last(params["b2"], Pp)
    g3, b3 = _pad_last(params["g3"], Cp), _pad_last(params["b3"], Cp)

    par = pltpu.CompilerParams(dimension_semantics=("parallel",),
                               vmem_limit_bytes=VMEM_LIMIT)
    grid = (N,)

    # ---- stage 1: conv1 (+ projection shortcut conv) + per-image stats ------
    in1 = [x_bf, w1p]
    spec1 = [_img_spec(x_bf.shape), _full_spec(w1p.shape)]
    out_shape1 = [jax.ShapeDtypeStruct((N, H, W, Pp), f32)]
    out_spec1 = [_img_spec((N, H, W, Pp))]
    if has_proj:
        wsp = _pad2d(params["ws"], Cin_p, Cp).astype(bf)
        gs, bs = _pad_last(params["gs"], Cp), _pad_last(params["bs"], Cp)
        in1.append(wsp)
        spec1.append(_full_spec(wsp.shape))
        out_shape1.append(jax.ShapeDtypeStruct((N, Ho, Wo, Cp), f32))
        out_spec1.append(_img_spec((N, Ho, Wo, Cp)))
    out_shape1.append(jax.ShapeDtypeStruct((N, 2, Pp), f32))
    out_spec1.append(_stats_spec(Pp))
    if has_proj:
        out_shape1.append(jax.ShapeDtypeStruct((N, 2, Cp), f32))
        out_spec1.append(_stats_spec(Cp))

    res1 = pl.pallas_call(
        functools.partial(stage1_kernel, stride=stride, has_proj=has_proj),
        grid=grid, in_specs=spec1, out_specs=out_spec1, out_shape=out_shape1,
        compiler_params=par)(*in1)
    if has_proj:
        h1_raw, sc_raw, st1, stsc = res1
    else:
        h1_raw, st1 = res1

    scale1, shift1 = _bn_scale_shift(st1, N * H * W, g1, b1)

    # ---- stage 2: bn1 + relu + 3x3 conv (im2col) + per-image stats -----------
    h2_raw, st2 = pl.pallas_call(
        functools.partial(stage2_kernel, stride=stride),
        grid=grid,
        in_specs=[_img_spec(h1_raw.shape), _full_spec(scale1.shape),
                  _full_spec(shift1.shape), _full_spec(w2flat.shape)],
        out_specs=[_img_spec((N, Ho, Wo, Pp)), _stats_spec(Pp)],
        out_shape=[jax.ShapeDtypeStruct((N, Ho, Wo, Pp), f32),
                   jax.ShapeDtypeStruct((N, 2, Pp), f32)],
        scratch_shapes=[pltpu.VMEM((H + 2, W + 2, Pp), jnp.bfloat16)],
        compiler_params=par)(h1_raw, scale1, shift1, w2flat)

    scale2, shift2 = _bn_scale_shift(st2, N * Ho * Wo, g2, b2)

    # ---- stage 3: bn2 + relu + conv3 (1x1) + per-image stats -----------------
    h3_raw, st3 = pl.pallas_call(
        stage3_kernel,
        grid=grid,
        in_specs=[_img_spec(h2_raw.shape), _full_spec(scale2.shape),
                  _full_spec(shift2.shape), _full_spec(w3p.shape)],
        out_specs=[_img_spec((N, Ho, Wo, Cp)), _stats_spec(Cp)],
        out_shape=[jax.ShapeDtypeStruct((N, Ho, Wo, Cp), f32),
                   jax.ShapeDtypeStruct((N, 2, Cp), f32)],
        compiler_params=par)(h2_raw, scale2, shift2, w3p)

    scale3, shift3 = _bn_scale_shift(st3, N * Ho * Wo, g3, b3)

    # ---- stage 4: bn3 + shortcut + add + relu (parallel over batch) ----------
    if has_proj:
        scale_s, shift_s = _bn_scale_shift(stsc, N * Ho * Wo, gs, bs)
        in4 = [h3_raw, scale3, shift3, sc_raw, scale_s, shift_s]
        spec4 = [_img_spec(h3_raw.shape), _full_spec(scale3.shape),
                 _full_spec(shift3.shape), _img_spec(sc_raw.shape),
                 _full_spec(scale_s.shape), _full_spec(shift_s.shape)]
    else:
        in4 = [h3_raw, scale3, shift3, xp]
        spec4 = [_img_spec(h3_raw.shape), _full_spec(scale3.shape),
                 _full_spec(shift3.shape), _img_spec(xp.shape)]

    out_p = pl.pallas_call(
        functools.partial(stage4_kernel, has_proj=has_proj),
        grid=grid, in_specs=spec4,
        out_specs=_img_spec((N, Ho, Wo, Cp)),
        out_shape=jax.ShapeDtypeStruct((N, Ho, Wo, Cp), f32),
        compiler_params=par)(*in4)

    out = out_p[:, :, :, :Cout]                 # drop lane padding
    return jnp.transpose(out, (0, 3, 1, 2))     # NHWC -> NCHW


# ---------------------------- pure-JAX reference ------------------------------
def reference_forward(x_nchw, params, stride=1):
    """Reference with matching numerics: bf16 conv operands, f32 accumulation,
    f32 training-mode BatchNorm (biased variance)."""
    x = jnp.transpose(x_nchw, (0, 2, 3, 1)).astype(jnp.float32)
    Cin = x.shape[-1]
    Cout = EXPANSION * params["w1"].shape[1]
    has_proj = (stride != 1) or (Cin != Cout)
    bf = jnp.bfloat16

    def conv1x1(a, w, s=1):
        return lax.conv_general_dilated(
            a.astype(bf), w[None, None].astype(bf), (s, s), "VALID",
            dimension_numbers=("NHWC", "HWIO", "NHWC"),
            preferred_element_type=jnp.float32)

    def conv3x3(a, w, s):
        return lax.conv_general_dilated(
            a.astype(bf), w.astype(bf), (s, s), ((1, 1), (1, 1)),
            dimension_numbers=("NHWC", "HWIO", "NHWC"),
            preferred_element_type=jnp.float32)

    def bn(a, g, b):
        mean = jnp.mean(a, axis=(0, 1, 2), keepdims=True)
        var = jnp.mean((a - mean) ** 2, axis=(0, 1, 2), keepdims=True)
        return ((a - mean) * lax.rsqrt(var + BN_EPS)
                * g.reshape(1, 1, 1, -1) + b.reshape(1, 1, 1, -1))

    h = jax.nn.relu(bn(conv1x1(x, params["w1"]), params["g1"], params["b1"]))
    h = jax.nn.relu(bn(conv3x3(h, params["w2"], stride),
                       params["g2"], params["b2"]))
    h = bn(conv1x1(h, params["w3"]), params["g3"], params["b3"])
    if has_proj:
        sc = bn(conv1x1(x, params["ws"], stride), params["gs"], params["bs"])
    else:
        sc = x
    return jnp.transpose(jax.nn.relu(h + sc), (0, 3, 1, 2))


def init_params(key, in_planes, planes):
    cout = EXPANSION * planes
    ks = jax.random.split(key, 12)
    f32 = jnp.float32
    return {
        # 1x1 convs stored as (Cin, Cout); 3x3 as (3, 3, Cin, Cout) HWIO.
        "w1": 0.2 * jax.random.normal(ks[0], (in_planes, planes), f32),
        "g1": 1.0 + 0.1 * jax.random.normal(ks[1], (1, planes), f32),
        "b1": 0.1 * jax.random.normal(ks[2], (1, planes), f32),
        "w2": 0.2 * jax.random.normal(ks[3], (3, 3, planes, planes), f32),
        "g2": 1.0 + 0.1 * jax.random.normal(ks[4], (1, planes), f32),
        "b2": 0.1 * jax.random.normal(ks[5], (1, planes), f32),
        "w3": 0.2 * jax.random.normal(ks[6], (planes, cout), f32),
        "g3": 1.0 + 0.1 * jax.random.normal(ks[7], (1, cout), f32),
        "b3": 0.1 * jax.random.normal(ks[8], (1, cout), f32),
        "ws": 0.2 * jax.random.normal(ks[9], (in_planes, cout), f32),
        "gs": 1.0 + 0.1 * jax.random.normal(ks[10], (1, cout), f32),
        "bs": 0.1 * jax.random.normal(ks[11], (1, cout), f32),
    }


if __name__ == "__main__":
    key = jax.random.PRNGKey(0)
    configs = [
        # (N, in_planes, planes, H, W, stride)
        (2, 16, 8, 8, 8, 1),   # projection shortcut (in_planes != 4*planes)
        (2, 32, 8, 8, 8, 1),   # identity shortcut   (in_planes == 4*planes)
    ]
    for (N, in_planes, planes, H, W, stride) in configs:
        key, kx, kp = jax.random.split(key, 3)
        x = jax.random.normal(kx, (N, in_planes, H, W), jnp.float32)  # NCHW
        params = init_params(kp, in_planes, planes)

        out = jax.block_until_ready(bottleneck_forward(x, params, stride=stride))
        ref = jax.block_until_ready(reference_forward(x, params, stride=stride))

        Cout = EXPANSION * planes
        Ho = (H - 1) // stride + 1
        Wo = (W - 1) // stride + 1
        assert out.shape == (N, Cout, Ho, Wo), out.shape
        err = float(jnp.max(jnp.abs(out - ref)))
        assert jnp.allclose(out, ref, atol=5e-3, rtol=5e-3), err

    print("KERNEL_OK")
</pallas_src>

<mosaic_0001>
module attributes {stable_mosaic.version = 11 : i64} {
  func.func @stage1_kernel(%arg0: i32, %arg1: memref<1x8x8x128xbf16, #tpu.memory_space<vmem>>, %arg2: memref<128x128xbf16, #tpu.memory_space<vmem>>, %arg3: memref<128x128xbf16, #tpu.memory_space<vmem>>, %arg4: memref<1x8x8x128xf32, #tpu.memory_space<vmem>>, %arg5: memref<1x8x8x128xf32, #tpu.memory_space<vmem>>, %arg6: memref<1x2x128xf32, #tpu.memory_space<vmem>>, %arg7: memref<1x2x128xf32, #tpu.memory_space<vmem>>) attributes {dimension_semantics = [#tpu.dimension_semantics<parallel>], iteration_bounds = array<i64: 2>, scalar_prefetch = 0 : i64, scratch_operands = 0 : i64, tpu.core_type = #tpu.core_type<tc>, window_params = [{transform_indices = @transform_0, window_bounds = array<i64: 1, 8, 8, 128>}, {pipeline_mode = #tpu.pipeline_mode<synchronous>, transform_indices = @transform_1, window_bounds = array<i64: 128, 128>}, {pipeline_mode = #tpu.pipeline_mode<synchronous>, transform_indices = @transform_2, window_bounds = array<i64: 128, 128>}, {transform_indices = @transform_3, window_bounds = array<i64: 1, 8, 8, 128>}, {transform_indices = @transform_4, window_bounds = array<i64: 1, 8, 8, 128>}, {transform_indices = @transform_5, window_bounds = array<i64: 1, 2, 128>}, {transform_indices = @transform_6, window_bounds = array<i64: 1, 2, 128>}]} {
    %c0 = arith.constant 0 : index
    %c0_0 = arith.constant 0 : index
    %c0_1 = arith.constant 0 : index
    %c0_2 = arith.constant 0 : index
    %0 = vector.load %arg1[%c0, %c0_0, %c0_1, %c0_2] : memref<1x8x8x128xbf16, #tpu.memory_space<vmem>>, vector<1x8x8x128xbf16>
    %1 = vector.shape_cast %0 : vector<1x8x8x128xbf16> to vector<64x128xbf16>
    %c0_3 = arith.constant 0 : index
    %c0_4 = arith.constant 0 : index
    %2 = vector.load %arg2[%c0_3, %c0_4] : memref<128x128xbf16, #tpu.memory_space<vmem>>, vector<128x128xbf16>
    %cst = arith.constant dense<0.000000e+00> : vector<64x128xf32>
    %3 = tpu.matmul %1, %2, %cst {dimension_numbers = #tpu.dot_dimension_numbers<[1], [0], [0], [1], [0, 0, 1, 1], [], []>} : vector<64x128xbf16>, vector<128x128xbf16>, vector<64x128xf32> -> vector<64x128xf32>
    %4 = vector.shape_cast %3 : vector<64x128xf32> to vector<1x8x8x128xf32>
    %c0_5 = arith.constant 0 : index
    %c0_6 = arith.constant 0 : index
    %c0_7 = arith.constant 0 : index
    %c0_8 = arith.constant 0 : index
    %5 = vector.load %arg4[%c0_5, %c0_6, %c0_7, %c0_8] : memref<1x8x8x128xf32, #tpu.memory_space<vmem>>, vector<1x8x8x128xf32>
    tpu.vector_store %arg4[%c0_5, %c0_6, %c0_7, %c0_8], %4 {strides = array<i32>} : memref<1x8x8x128xf32, #tpu.memory_space<vmem>>, vector<1x8x8x128xf32>,
    %cst_9 = arith.constant dense<0.000000e+00> : vector<128xf32>
    %6 = vector.multi_reduction <add>, %3, %cst_9 [0] : vector<64x128xf32> to vector<128xf32>
    %7 = vector.shape_cast %6 : vector<128xf32> to vector<1x128xf32>
    %8 = arith.mulf %3, %3 : vector<64x128xf32>
    %cst_10 = arith.constant dense<0.000000e+00> : vector<128xf32>
    %9 = vector.multi_reduction <add>, %8, %cst_10 [0] : vector<64x128xf32> to vector<128xf32>
    %10 = vector.shape_cast %9 : vector<128xf32> to vector<1x128xf32>
    %11 = tpu.concatenate %7, %10 in 0 : vector<1x128xf32>, vector<1x128xf32> -> vector<2x128xf32>
    %12 = vector.shape_cast %11 : vector<2x128xf32> to vector<1x2x128xf32>
    %c0_11 = arith.constant 0 : index
    %c0_12 = arith.constant 0 : index
    %c0_13 = arith.constant 0 : index
    %13 = vector.load %arg6[%c0_11, %c0_12, %c0_13] : memref<1x2x128xf32, #tpu.memory_space<vmem>>, vector<1x2x128xf32>
    tpu.vector_store %arg6[%c0_11, %c0_12, %c0_13], %12 {strides = array<i32>} : memref<1x2x128xf32, #tpu.memory_space<vmem>>, vector<1x2x128xf32>,
    %14 = vector.shape_cast %0 : vector<1x8x8x128xbf16> to vector<64x128xbf16>
    %c0_14 = arith.constant 0 : index
    %c0_15 = arith.constant 0 : index
    %15 = vector.load %arg3[%c0_14, %c0_15] : memref<128x128xbf16, #tpu.memory_space<vmem>>, vector<128x128xbf16>
    %cst_16 = arith.constant dense<0.000000e+00> : vector<64x128xf32>
    %16 = tpu.matmul %14, %15, %cst_16 {dimension_numbers = #tpu.dot_dimension_numbers<[1], [0], [0], [1], [0, 0, 1, 1], [], []>} : vector<64x128xbf16>, vector<128x128xbf16>, vector<64x128xf32> -> vector<64x128xf32>
    %17 = vector.shape_cast %16 : vector<64x128xf32> to vector<1x8x8x128xf32>
    %c0_17 = arith.constant 0 : index
    %c0_18 = arith.constant 0 : index
    %c0_19 = arith.constant 0 : index
    %c0_20 = arith.constant 0 : index
    %18 = vector.load %arg5[%c0_17, %c0_18, %c0_19, %c0_20] : memref<1x8x8x128xf32, #tpu.memory_space<vmem>>, vector<1x8x8x128xf32>
    tpu.vector_store %arg5[%c0_17, %c0_18, %c0_19, %c0_20], %17 {strides = array<i32>} : memref<1x8x8x128xf32, #tpu.memory_space<vmem>>, vector<1x8x8x128xf32>,
    %cst_21 = arith.constant dense<0.000000e+00> : vector<128xf32>
    %19 = vector.multi_reduction <add>, %16, %cst_21 [0] : vector<64x128xf32> to vector<128xf32>
    %20 = vector.shape_cast %19 : vector<128xf32> to vector<1x128xf32>
    %21 = arith.mulf %16, %16 : vector<64x128xf32>
    %cst_22 = arith.constant dense<0.000000e+00> : vector<128xf32>
    %22 = vector.multi_reduction <add>, %21, %cst_22 [0] : vector<64x128xf32> to vector<128xf32>
    %23 = vector.shape_cast %22 : vector<128xf32> to vector<1x128xf32>
    %24 = tpu.concatenate %20, %23 in 0 : vector<1x128xf32>, vector<1x128xf32> -> vector<2x128xf32>
    %25 = vector.shape_cast %24 : vector<2x128xf32> to vector<1x2x128xf32>
    %c0_23 = arith.constant 0 : index
    %c0_24 = arith.constant 0 : index
    %c0_25 = arith.constant 0 : index
    %26 = vector.load %arg7[%c0_23, %c0_24, %c0_25] : memref<1x2x128xf32, #tpu.memory_space<vmem>>, vector<1x2x128xf32>
    tpu.vector_store %arg7[%c0_23, %c0_24, %c0_25], %25 {strides = array<i32>} : memref<1x2x128xf32, #tpu.memory_space<vmem>>, vector<1x2x128xf32>,
    return
  }
  func.func @transform_0(%arg0: i32) -> (i32, i32, i32, i32) {
    %c0_i32 = arith.constant 0 : i32
    %c0_i32_0 = arith.constant 0 : i32
    %c0_i32_1 = arith.constant 0 : i32
    %c0_i32_2 = arith.constant 0 : i32
    return %arg0, %c0_i32, %c0_i32_0, %c0_i32_1 : i32, i32, i32, i32
  }
  func.func @transform_1(%arg0: i32) -> (i32, i32) {
    %c0_i32 = arith.constant 0 : i32
    %c0_i32_0 = arith.constant 0 : i32
    %c0_i32_1 = arith.constant 0 : i32
    return %c0_i32, %c0_i32_0 : i32, i32
  }
  func.func @transform_2(%arg0: i32) -> (i32, i32) {
    %c0_i32 = arith.constant 0 : i32
    %c0_i32_0 = arith.constant 0 : i32
    %c0_i32_1 = arith.constant 0 : i32
    return %c0_i32, %c0_i32_0 : i32, i32
  }
  func.func @transform_3(%arg0: i32) -> (i32, i32, i32, i32) {
    %c0_i32 = arith.constant 0 : i32
    %c0_i32_0 = arith.constant 0 : i32
    %c0_i32_1 = arith.constant 0 : i32
    %c0_i32_2 = arith.constant 0 : i32
    return %arg0, %c0_i32, %c0_i32_0, %c0_i32_1 : i32, i32, i32, i32
  }
  func.func @transform_4(%arg0: i32) -> (i32, i32, i32, i32) {
    %c0_i32 = arith.constant 0 : i32
    %c0_i32_0 = arith.constant 0 : i32
    %c0_i32_1 = arith.constant 0 : i32
    %c0_i32_2 = arith.constant 0 : i32
    return %arg0, %c0_i32, %c0_i32_0, %c0_i32_1 : i32, i32, i32, i32
  }
  func.func @transform_5(%arg0: i32) -> (i32, i32, i32) {
    %c0_i32 = arith.constant 0 : i32
    %c0_i32_0 = arith.constant 0 : i32
    %c0_i32_1 = arith.constant 0 : i32
    return %arg0, %c0_i32, %c0_i32_0 : i32, i32, i32
  }
  func.func @transform_6(%arg0: i32) -> (i32, i32, i32) {
    %c0_i32 = arith.constant 0 : i32
    %c0_i32_0 = arith.constant 0 : i32
    %c0_i32_1 = arith.constant 0 : i32
    return %arg0, %c0_i32, %c0_i32_0 : i32, i32, i32
  }
}

</mosaic_0001>

<llo_original>
// kernel: tpu_custom_call.1
$region0: #{tpu_custom_call.1}
  #allocation0 [shape = 'u32[]', space=smem, size = 0x4, offset = 0x4, fixed_abs, tag = 'smem constant byte address 0x4 - core index']
  #allocation1 [shape = 'u32[144,128]{1,0:T(1,128)}', space=vmem, size = 0x12000, scoped, tag = 'internal scratch']
  %s0 = inlined_call_operand.hbm [shape: bf16[2,8,8,128], index: 0, kind: input, shape index: {}]
  %s1 = inlined_call_operand.hbm [shape: bf16[128,128], index: 1, kind: input, shape index: {}]
  %s2 = inlined_call_operand.hbm [shape: bf16[128,128], index: 2, kind: input, shape index: {}]
  %s3 = inlined_call_operand.hbm [shape: f32[2,8,8,128], index: 3, kind: output, shape index: {0}]
  %s4 = inlined_call_operand.hbm [shape: f32[2,8,8,128], index: 4, kind: output, shape index: {1}]
  %s5 = inlined_call_operand.hbm [shape: f32[2,2,128], index: 5, kind: output, shape index: {2}]
  %s6 = inlined_call_operand.hbm [shape: f32[2,2,128], index: 6, kind: output, shape index: {3}]
  %7 = xla_tuple %s3, %s4, %s5, %s6
  %s8 = sld [smem:[#allocation0]]
  $region81: #{tpu_custom_call.1} parent=0
    _
  %s10 = ssub.s32 1, %s8
  %s11 = scalar_select 0, %s10, %s8
  $region1: #{tpu_custom_call.1} parent=0
    #allocation2 [shape = 'u8[32768]{0}', space=vmem, size = 0x8000, scoped, tag = 'input window, operand 0']
    #allocation3 [shape = 's32[2]{0}', space=sflag, size = 0x8, scoped, tag = 'scoped memory for tpu_custom_call.1']
    #allocation4 [shape = 's32[2]{0}', space=sflag, size = 0x8, scoped, tag = 'scoped memory for tpu_custom_call.1']
    #allocation5 [shape = 'u8[32768]{0}', space=vmem, size = 0x8000, scoped, tag = 'input window, operand 1, single buffered']
    #allocation6 [shape = 's32[1]{0}', space=sflag, size = 0x4, scoped, tag = 'scoped memory for tpu_custom_call.1']
    #allocation7 [shape = 'u8[32768]{0}', space=vmem, size = 0x8000, scoped, tag = 'input window, operand 2, single buffered']
    #allocation8 [shape = 'u8[65536]{0}', space=vmem, size = 0x10000, scoped, tag = 'output window, operand 0']
    #allocation9 [shape = 'u8[65536]{0}', space=vmem, size = 0x10000, scoped, tag = 'output window, operand 1']
    #allocation10 [shape = 's32[2]{0}', space=sflag, size = 0x8, scoped, tag = 'scoped memory for tpu_custom_call.1']
    #allocation11 [shape = 'u8[2048]{0}', space=vmem, size = 0x800, scoped, tag = 'output window, operand 2']
    #allocation12 [shape = 'u8[2048]{0}', space=vmem, size = 0x800, scoped, tag = 'output window, operand 3']
    #allocation13 [shape = 's32[2]{0}', space=sflag, size = 0x8, scoped, tag = 'scoped memory for tpu_custom_call.1']
    %12 = vsyncpa [#allocation3], 0
    %s13 = scalar_lea.sflag [#allocation3], 1
    %14 = vsyncpa %s13, 0
    %15 = vsyncpa [#allocation6], 0
    %16 = vsyncpa [#allocation4], 0
    %s17 = scalar_lea.sflag [#allocation4], 1
    %18 = vsyncpa %s17, 0
    %19 = vsyncpa [#allocation10], 0
    %s20 = scalar_lea.sflag [#allocation10], 1
    %21 = vsyncpa %s20, 0
    %22 = vsyncpa [#allocation13], 0
    %s23 = scalar_lea.sflag [#allocation13], 1
    %24 = vsyncpa %s23, 0
    loop: start=0, step=1, limit=4
    $region2: #{tpu_custom_call.1} parent=1 // loop_pre_header
      _
    $region3: #{tpu_custom_call.1} parent=1 // loop_header
      %s26 = sphi 0, %s30
      %p27 = scmp.ge.s32.totalorder %s26, 4
      %s36 = sphi 0, %s38
      %s39 = sphi 0, %s36
      %s40 = sphi 0, %s39
      %s56 = sphi 0, %s40
      %s60 = sphi 0, %s60
      %s62 = sphi 0, %s60
      %s63 = sphi 0, %s62
      %s77 = sphi 0, %s63
      %s81 = sphi 0, %s81
      %s83 = sphi 0, %s81
      %s84 = sphi 0, %s83
      %s98 = sphi 0, %s84
      %s104 = sphi 0, %s106
      %s107 = sphi 0, %s104
      %s108 = sphi 0, %s107
      %s124 = sphi 0, %s108
      %s130 = sphi 0, %s132
      %s133 = sphi 0, %s130
      %s134 = sphi 0, %s133
      %s150 = sphi 0, %s134
      %s156 = sphi 0, %s158
      %s159 = sphi 0, %s156
      %s160 = sphi 0, %s159
      %s176 = sphi 0, %s160
      %s182 = sphi 0, %s184
      %s185 = sphi 0, %s182
      %s186 = sphi 0, %s185
      %s202 = sphi 0, %s186
    $region4: #{tpu_custom_call.1} parent=1 // loop_header_branch
      %29 = sbr.rel (%p27) target = $region8
    $region5: #{tpu_custom_call.1} parent=1 // loop_body
      %s31 = ssub.s32 %s26, 1
      %s32 = ssub.s32 %s26, 2
      %s33 = sadd.s32 %s26, 1
      %s34 = ssub.s32 %s26, %s33
      %p35 = scmp.eq.s32.totalorder %s34, 0
      %s37 = sadd.s32 %s36, 1
      %s38 = scalar_select %p35, %s36, %s37
      %p41 = pneg %p35
      %p42 = scmp.eq.s32.totalorder %s26, 1
      %p43 = por %p41, %p42
      %p44 = scmp.ne.s32.totalorder %s36, %s39
      %p45 = scmp.eq.s32.totalorder %s26, 0
      %p46 = por %p44, %p45
      %p47 = scmp.ne.s32.totalorder %s36, %s39
      %p48 = scmp.eq.s32.totalorder %s31, 1
      %p49 = por %p47, %p48
      %p50 = scmp.ne.s32.totalorder %s39, %s40
      %p51 = scmp.eq.s32.totalorder %s31, 0
      %p52 = por %p50, %p51
      %p53 = scmp.ne.s32.totalorder %s39, %s40
      %p54 = scmp.eq.s32.totalorder %s32, 1
      %p55 = por %p53, %p54
      %p57 = scmp.ne.s32.totalorder %s40, %s56
      %p58 = scmp.eq.s32.totalorder %s32, 0
      %p59 = por %p57, %p58
      %s61 = sadd.s32 %s60, 1
      %p64 = scmp.eq.s32.totalorder %s26, 1
      %p65 = scmp.ne.s32.totalorder %s60, %s62
      %p66 = scmp.eq.s32.totalorder %s26, 0
      %p67 = por %p65, %p66
      %p68 = scmp.ne.s32.totalorder %s60, %s62
      %p69 = scmp.eq.s32.totalorder %s31, 1
      %p70 = por %p68, %p69
      %p71 = scmp.ne.s32.totalorder %s62, %s63
      %p72 = scmp.eq.s32.totalorder %s31, 0
      %p73 = por %p71, %p72
      %p74 = scmp.ne.s32.totalorder %s62, %s63
      %p75 = scmp.eq.s32.totalorder %s32, 1
      %p76 = por %p74, %p75
      %p78 = scmp.ne.s32.totalorder %s63, %s77
      %p79 = scmp.eq.s32.totalorder %s32, 0
      %p80 = por %p78, %p79
      %s82 = sadd.s32 %s81, 1
      %p85 = scmp.eq.s32.totalorder %s26, 1
      %p86 = scmp.ne.s32.totalorder %s81, %s83
      %p87 = scmp.eq.s32.totalorder %s26, 0
      %p88 = por %p86, %p87
      %p89 = scmp.ne.s32.totalorder %s81, %s83
      %p90 = scmp.eq.s32.totalorder %s31, 1
      %p91 = por %p89, %p90
      %p92 = scmp.ne.s32.totalorder %s83, %s84
      %p93 = scmp.eq.s32.totalorder %s31, 0
      %p94 = por %p92, %p93
      %p95 = scmp.ne.s32.totalorder %s83, %s84
      %p96 = scmp.eq.s32.totalorder %s32, 1
      %p97 = por %p95, %p96
      %p99 = scmp.ne.s32.totalorder %s84, %s98
      %p100 = scmp.eq.s32.totalorder %s32, 0
      %p101 = por %p99, %p100
      %s102 = ssub.s32 %s26, %s33
      %p103 = scmp.eq.s32.totalorder %s102, 0
      %s105 = sadd.s32 %s104, 1
      %s106 = scalar_select %p103, %s104, %s105
      %p109 = pneg %p103
      %p110 = scmp.eq.s32.totalorder %s26, 1
      %p111 = por %p109, %p110
      %p112 = scmp.ne.s32.totalorder %s104, %s107
      %p113 = scmp.eq.s32.totalorder %s26, 0
      %p114 = por %p112, %p113
      %p115 = scmp.ne.s32.totalorder %s104, %s107
      %p116 = scmp.eq.s32.totalorder %s31, 1
      %p117 = por %p115, %p116
      %p118 = scmp.ne.s32.totalorder %s107, %s108
      %p119 = scmp.eq.s32.totalorder %s31, 0
      %p120 = por %p118, %p119
      %p121 = scmp.ne.s32.totalorder %s107, %s108
      %p122 = scmp.eq.s32.totalorder %s32, 1
      %p123 = por %p121, %p122
      %p125 = scmp.ne.s32.totalorder %s108, %s124
      %p126 = scmp.eq.s32.totalorder %s32, 0
      %p127 = por %p125, %p126
      %s128 = ssub.s32 %s26, %s33
      %p129 = scmp.eq.s32.totalorder %s128, 0
      %s131 = sadd.s32 %s130, 1
      %s132 = scalar_select %p129, %s130, %s131
      %p135 = pneg %p129
      %p136 = scmp.eq.s32.totalorder %s26, 1
      %p137 = por %p135, %p136
      %p138 = scmp.ne.s32.totalorder %s130, %s133
      %p139 = scmp.eq.s32.totalorder %s26, 0
      %p140 = por %p138, %p139
      %p141 = scmp.ne.s32.totalorder %s130, %s133
      %p142 = scmp.eq.s32.totalorder %s31, 1
      %p143 = por %p141, %p142
      %p144 = scmp.ne.s32.totalorder %s133, %s134
      %p145 = scmp.eq.s32.totalorder %s31, 0
      %p146 = por %p144, %p145
      %p147 = scmp.ne.s32.totalorder %s133, %s134
      %p148 = scmp.eq.s32.totalorder %s32, 1
      %p149 = por %p147, %p148
      %p151 = scmp.ne.s32.totalorder %s134, %s150
      %p152 = scmp.eq.s32.totalorder %s32, 0
      %p153 = por %p151, %p152
      %s154 = ssub.s32 %s26, %s33
      %p155 = scmp.eq.s32.totalorder %s154, 0
      %s157 = sadd.s32 %s156, 1
      %s158 = scalar_select %p155, %s156, %s157
      %p161 = pneg %p155
      %p162 = scmp.eq.s32.totalorder %s26, 1
      %p163 = por %p161, %p162
      %p164 = scmp.ne.s32.totalorder %s156, %s159
      %p165 = scmp.eq.s32.totalorder %s26, 0
      %p166 = por %p164, %p165
      %p167 = scmp.ne.s32.totalorder %s156, %s159
      %p168 = scmp.eq.s32.totalorder %s31, 1
      %p169 = por %p167, %p168
      %p170 = scmp.ne.s32.totalorder %s159, %s160
      %p171 = scmp.eq.s32.totalorder %s31, 0
      %p172 = por %p170, %p171
      %p173 = scmp.ne.s32.totalorder %s159, %s160
      %p174 = scmp.eq.s32.totalorder %s32, 1
      %p175 = por %p173, %p174
      %p177 = scmp.ne.s32.totalorder %s160, %s176
      %p178 = scmp.eq.s32.totalorder %s32, 0
      %p179 = por %p177, %p178
      %s180 = ssub.s32 %s26, %s33
      %p181 = scmp.eq.s32.totalorder %s180, 0
      %s183 = sadd.s32 %s182, 1
      %s184 = scalar_select %p181, %s182, %s183
      %p187 = pneg %p181
      %p188 = scmp.eq.s32.totalorder %s26, 1
      %p189 = por %p187, %p188
      %p190 = scmp.ne.s32.totalorder %s182, %s185
      %p191 = scmp.eq.s32.totalorder %s26, 0
      %p192 = por %p190, %p191
      %p193 = scmp.ne.s32.totalorder %s182, %s185
      %p194 = scmp.eq.s32.totalorder %s31, 1
      %p195 = por %p193, %p194
      %p196 = scmp.ne.s32.totalorder %s185, %s186
      %p197 = scmp.eq.s32.totalorder %s31, 0
      %p198 = por %p196, %p197
      %p199 = scmp.ne.s32.totalorder %s185, %s186
      %p200 = scmp.eq.s32.totalorder %s32, 1
      %p201 = por %p199, %p200
      %p203 = scmp.ne.s32.totalorder %s186, %s202
      %p204 = scmp.eq.s32.totalorder %s32, 0
      %p205 = por %p203, %p204
      %p206 = scmp.le.s32.totalorder 1, %s26
      %p207 = scmp.lt.s32.totalorder %s26, 3
      %p208 = pnand %p206, %p207
      %p209 = pneg %p208
      // Predicated region
      $region9: #{tpu_custom_call.1} parent=5 // pred_check
        _
      $region10: #{tpu_custom_call.1} parent=5 // pred_check_branch
        %211 = sbr.rel (%p208) target = $region12
      $region11: #{tpu_custom_call.1} parent=5 // pred_region
        %s212 = ssub.s32 %s26, 1
        // Predicated region
        $region13: #{tpu_custom_call.1} parent=11 // pred_check
          %p213 = pneg %p73
        $region14: #{tpu_custom_call.1} parent=11 // pred_check_branch
          %215 = sbr.rel (%p213) target = $region16
        $region15: #{tpu_custom_call.1} parent=11 // pred_region
          %s217 = ssub.s32 1024, 1024
          %218 = vsyncadd [#allocation6], %s217
          %s219 = sshll.u32 [#allocation5], 4
          %s220 = int_to_ptr.vmem [resolvable:$true] %s219
          %225 = dma.hbm_to_vmem [thread:$0]  %s1, 1024, %s220, [#allocation6], 64, 64, 4
        $region16: #{tpu_custom_call.1} parent=11 // pred_fallthru
          _
        // Predicated region
        $region17: #{tpu_custom_call.1} parent=11 // pred_check
          %p226 = pneg %p94
        $region18: #{tpu_custom_call.1} parent=11 // pred_check_branch
          %228 = sbr.rel (%p226) target = $region20
        $region19: #{tpu_custom_call.1} parent=11 // pred_region
          %s230 = ssub.s32 1024, 1024
          %231 = vsyncadd [#allocation6], %s230
          %s232 = sshll.u32 [#allocation7], 4
          %s233 = int_to_ptr.vmem [resolvable:$true] %s232
          %238 = dma.hbm_to_vmem [thread:$0]  %s2, 1024, %s233, [#allocation6], 64, 64, 4
        $region20: #{tpu_custom_call.1} parent=11 // pred_fallthru
          _
      $region12: #{tpu_custom_call.1} parent=5 // pred_fallthru
        _
      %p239 = scmp.lt.s32.totalorder %s26, 2
      // Predicated region
      $region21: #{tpu_custom_call.1} parent=5 // pred_check
        %p240 = pneg %p239
      $region22: #{tpu_custom_call.1} parent=5 // pred_check_branch
        %242 = sbr.rel (%p240) target = $region24
      $region23: #{tpu_custom_call.1} parent=5 // pred_region
        // Predicated region
        $region25: #{tpu_custom_call.1} parent=23 // pred_check
          %p243 = pneg %p46
        $region26: #{tpu_custom_call.1} parent=23 // pred_check_branch
          %245 = sbr.rel (%p243) target = $region28
        $region27: #{tpu_custom_call.1} parent=23 // pred_region
          %s246 = sand.u32 %s36, 1
          %s247 = scalar_lea.sflag [#allocation3], %s246
          %s248 = sand.u32 %s36, 1
          %s249 = smul.addr %s248, 32
          %s250 = scalar_lea.vmem [#allocation2], %s249
          %s252 = ssub.s32 512, 512
          %253 = vsyncadd %s247, %s252
          %s254 = smul.addr %s26, 8
          %s255 = smul.addr %s254, 64
          %s256 = scalar_lea.hbm %s0, %s255
          %s257 = sshll.u32 %s250, 4
          %s258 = int_to_ptr.vmem [resolvable:$true] %s257
          %263 = dma.hbm_to_vmem [thread:$0]  %s256, 512, %s258, %s247, 64, 64, 4
        $region28: #{tpu_custom_call.1} parent=23 // pred_fallthru
          _
      $region24: #{tpu_custom_call.1} parent=5 // pred_fallthru
        _
      %p264 = scmp.le.s32.totalorder 1, %s26
      %p265 = scmp.lt.s32.totalorder %s26, 3
      %p266 = pnand %p264, %p265
      %p267 = pneg %p266
      // Predicated region
      $region29: #{tpu_custom_call.1} parent=5 // pred_check
        _
      $region30: #{tpu_custom_call.1} parent=5 // pred_check_branch
        %269 = sbr.rel (%p266) target = $region32
      $region31: #{tpu_custom_call.1} parent=5 // pred_region
        %s270 = ssub.s32 %s26, 1
        %s271 = sand.u32 %s39, 1
        %s272 = scalar_lea.sflag [#allocation3], %s271
        %s273 = sand.u32 %s39, 1
        %s274 = smul.addr %s273, 32
        %s275 = scalar_lea.vmem [#allocation2], %s274
        // Predicated region
        $region33: #{tpu_custom_call.1} parent=31 // pred_check
          %p276 = pneg %p52
        $region34: #{tpu_custom_call.1} parent=31 // pred_check_branch
          %278 = sbr.rel (%p276) target = $region36
        $region35: #{tpu_custom_call.1} parent=31 // pred_region
          %279 = dma.done %s272, 512
        $region36: #{tpu_custom_call.1} parent=31 // pred_fallthru
          _
        // Predicated region
        $region37: #{tpu_custom_call.1} parent=31 // pred_check
          %p280 = pneg %p73
        $region38: #{tpu_custom_call.1} parent=31 // pred_check_branch
          %282 = sbr.rel (%p280) target = $region40
        $region39: #{tpu_custom_call.1} parent=31 // pred_region
          %283 = dma.done [#allocation6], 1024
        $region40: #{tpu_custom_call.1} parent=31 // pred_fallthru
          _
        // Predicated region
        $region41: #{tpu_custom_call.1} parent=31 // pred_check
          %p284 = pneg %p94
        $region42: #{tpu_custom_call.1} parent=31 // pred_check_branch
          %286 = sbr.rel (%p284) target = $region44
        $region43: #{tpu_custom_call.1} parent=31 // pred_region
          %287 = dma.done [#allocation6], 1024
        $region44: #{tpu_custom_call.1} parent=31 // pred_fallthru
          _
        %s288 = sand.u32 %s39, 1
        %s289 = scalar_lea.sflag [#allocation3], %s288
        %s290 = sand.u32 %s39, 1
        %s291 = smul.addr %s290, 32
        %s292 = scalar_lea.vmem [#allocation2], %s291
        %p293 = pneg %p52
        %p294 = pneg %p49
        %p295 = pneg %p73
        %p296 = pneg %p70
        %p297 = pneg %p94
        %p298 = pneg %p91
        %p299 = pneg %p120
        %p300 = pneg %p117
        %s301 = sand.u32 %s107, 1
        %s302 = scalar_lea.sflag [#allocation4], %s301
        %s303 = sand.u32 %s107, 1
        %s304 = smul.addr %s303, 64
        %s305 = scalar_lea.vmem [#allocation8], %s304
        %p306 = pneg %p146
        %p307 = pneg %p143
        %s308 = sand.u32 %s31, 1
        %s309 = scalar_lea.sflag [#allocation10], %s308
        %s310 = sand.u32 %s133, 1
        %s311 = smul.addr %s310, 64
        %s312 = scalar_lea.vmem [#allocation9], %s311
        %p313 = pneg %p172
        %p314 = pneg %p169
        %s315 = sand.u32 %s31, 1
        %s316 = scalar_lea.sflag [#allocation10], %s315
        %s317 = sand.u32 %s159, 1
        %s318 = smul.addr %s317, 2
        %s319 = scalar_lea.vmem [#allocation11], %s318
        %p320 = pneg %p198
        %p321 = pneg %p195
        %s322 = sand.u32 %s185, 1
        %s323 = scalar_lea.sflag [#allocation13], %s322
        %s324 = sand.u32 %s185, 1
        %s325 = smul.addr %s324, 2
        %s326 = scalar_lea.vmem [#allocation12], %s325
        %v328 = vld [vmem:[%s275] sm:$0xf]
        %v329 = vld [vmem:[%s275 + $0x4] sm:$0xf]
        %v330 = vld [vmem:[%s275 + $0x8] sm:$0xf]
        %v331 = vld [vmem:[%s275 + $0xc] sm:$0xf]
        %v332 = vld [vmem:[%s275 + $0x10] sm:$0xf]
        %v333 = vld [vmem:[%s275 + $0x14] sm:$0xf]
        %v334 = vld [vmem:[%s275 + $0x18] sm:$0xf]
        %v335 = vld [vmem:[%s275 + $0x1c] sm:$0xf]
        %v336 = vld [vmem:[#allocation5] sm:$0xf]
        %v337 = vld [vmem:[#allocation5 + $0x4] sm:$0xf]
        %v338 = vld [vmem:[#allocation5 + $0x8] sm:$0xf]
        %v339 = vld [vmem:[#allocation5 + $0xc] sm:$0xf]
        %v340 = vld [vmem:[#allocation5 + $0x10] sm:$0xf]
        %v341 = vld [vmem:[#allocation5 + $0x14] sm:$0xf]
        %v342 = vld [vmem:[#allocation5 + $0x18] sm:$0xf]
        %v343 = vld [vmem:[#allocation5 + $0x1c] sm:$0xf]
        %v344 = vld [vmem:[#allocation5 + $0x20] sm:$0xf]
        %v345 = vld [vmem:[#allocation5 + $0x24] sm:$0xf]
        %v346 = vld [vmem:[#allocation5 + $0x28] sm:$0xf]
        %v347 = vld [vmem:[#allocation5 + $0x2c] sm:$0xf]
        %v348 = vld [vmem:[#allocation5 + $0x30] sm:$0xf]
        %v349 = vld [vmem:[#allocation5 + $0x34] sm:$0xf]
        %v350 = vld [vmem:[#allocation5 + $0x38] sm:$0xf]
        %v351 = vld [vmem:[#allocation5 + $0x3c] sm:$0xf]
        %v360 = vunpack.c.l.b16 %v328
        %v361 = vunpack.c.l.b16 %v329
        %v362 = vunpack.c.l.b16 %v330
        %v363 = vunpack.c.l.b16 %v331
        %v364 = vunpack.c.l.b16 %v332
        %v365 = vunpack.c.l.b16 %v333
        %v366 = vunpack.c.l.b16 %v334
        %v367 = vunpack.c.l.b16 %v335
        %v368 = vpack.c.b16 %v361, %v360
        %v369 = vpack.c.b16 %v363, %v362
        %v370 = vpack.c.b16 %v365, %v364
        %v371 = vpack.c.b16 %v367, %v366
        %v392 = vunpack.c.l.b16 %v336
        %v393 = vunpack.c.l.b16 %v337
        %v394 = vunpack.c.l.b16 %v338
        %v395 = vunpack.c.l.b16 %v339
        %v396 = vunpack.c.l.b16 %v340
        %v397 = vunpack.c.l.b16 %v341
        %v398 = vunpack.c.l.b16 %v342
        %v399 = vunpack.c.l.b16 %v343
        %v400 = vunpack.c.l.b16 %v344
        %v401 = vunpack.c.l.b16 %v345
        %v402 = vunpack.c.l.b16 %v346
        %v403 = vunpack.c.l.b16 %v347
        %v404 = vunpack.c.l.b16 %v348
        %v405 = vunpack.c.l.b16 %v349
        %v406 = vunpack.c.l.b16 %v350
        %v407 = vunpack.c.l.b16 %v351
        %v408 = vpack.c.b16 %v393, %v392
        %v409 = vpack.c.b16 %v395, %v394
        %v410 = vpack.c.b16 %v397, %v396
        %v411 = vpack.c.b16 %v399, %v398
        %v412 = vpack.c.b16 %v401, %v400
        %v413 = vpack.c.b16 %v403, %v402
        %v414 = vpack.c.b16 %v405, %v404
        %v415 = vpack.c.b16 %v407, %v406
        %424 = vmatprep.subr.bf16.mxu0 0
        %425 = vmatpush1.bf16.msra.mxu0 %v415
        %426 = vmatprep.subr.bf16.mxu0 0
        %427 = vmatpush1.bf16.msra.mxu0 %v414
        %428 = vmatprep.subr.bf16.mxu0 0
        %429 = vmatpush1.bf16.msra.mxu0 %v413
        %430 = vmatprep.subr.bf16.mxu0 0
        %431 = vmatpush1.bf16.msra.mxu0 %v412
        %432 = vmatprep.subr.bf16.mxu0 0
        %433 = vmatpush1.bf16.msra.mxu0 %v411
        %434 = vmatprep.subr.bf16.mxu0 0
        %435 = vmatpush1.bf16.msra.mxu0 %v410
        %436 = vmatprep.subr.bf16.mxu0 0
        %437 = vmatpush1.bf16.msra.mxu0 %v409
        %438 = vmatprep.subr.bf16.mxu0 0
        %439 = vmatpush1.bf16.msra.mxu0 %v408
        %440 = vmatprep.subr.bf16.mxu0 0
        %441 = vmatpush2.bf16.msra.mxu0 0
        %442 = vmatprep.subr.bf16.mxu0 0
        %443 = vmatpush2.bf16.msra.mxu0 0
        %444 = vmatprep.subr.bf16.mxu0 0
        %445 = vmatpush2.bf16.msra.mxu0 0
        %446 = vmatprep.subr.bf16.mxu0 0
        %447 = vmatpush2.bf16.msra.mxu0 0
        %448 = vmatprep.subr.bf16.mxu0 0
        %449 = vmatpush2.bf16.msra.mxu0 0
        %450 = vmatprep.subr.bf16.mxu0 0
        %451 = vmatpush2.bf16.msra.mxu0 0
        %452 = vmatprep.subr.bf16.mxu0 0
        %453 = vmatpush2.bf16.msra.mxu0 0
        %454 = vmatprep.subr.bf16.mxu0 0
        %455 = vmatpush2.bf16.msra.mxu0 0
        %456 = vmatprep.mubr.bf16.mxu0 0
        %457 = vmatmul.mubr.bf16.gmra.mxu0 %v368
        %v458 = vpop.f32.mrf.mxu0
        %v459 = vadd.f32 0.0, %v458
        %v460 = vpop.f32.mrf.mxu0
        %v461 = vpop.f32.mrf.mxu0
        %v462 = vadd.f32 0.0, %v461
        %v463 = vpop.f32.mrf.mxu0
        %464 = vmatprep.mubr.bf16.mxu0 0
        %465 = vmatmul.mubr.bf16.gmra.mxu0 %v369
        %v466 = vpop.f32.mrf.mxu0
        %v467 = vadd.f32 0.0, %v466
        %v468 = vpop.f32.mrf.mxu0
        %v469 = vpop.f32.mrf.mxu0
        %v470 = vadd.f32 0.0, %v469
        %v471 = vpop.f32.mrf.mxu0
        %472 = vmatprep.mubr.bf16.mxu0 0
        %473 = vmatmul.mubr.bf16.gmra.mxu0 %v370
        %v474 = vpop.f32.mrf.mxu0
        %v475 = vadd.f32 0.0, %v474
        %v476 = vpop.f32.mrf.mxu0
        %v477 = vpop.f32.mrf.mxu0
        %v478 = vadd.f32 0.0, %v477
        %v479 = vpop.f32.mrf.mxu0
        %480 = vmatprep.mubr.bf16.mxu0 0
        %481 = vmatmul.mubr.bf16.gmra.mxu0 %v371
        %v482 = vpop.f32.mrf.mxu0
        %v483 = vadd.f32 0.0, %v482
        %v484 = vpop.f32.mrf.mxu0
        %v485 = vpop.f32.mrf.mxu0
        %v486 = vadd.f32 0.0, %v485
        %v487 = vpop.f32.mrf.mxu0
        %488 = vdwg.mxu0
        %489 = vst [vmem:[%s305] sm:$0xff] %v459
        %490 = vst [vmem:[%s305 + $0x8] sm:$0xff] %v462
        %491 = vst [vmem:[%s305 + $0x10] sm:$0xff] %v467
        %492 = vst [vmem:[%s305 + $0x18] sm:$0xff] %v470
        %493 = vst [vmem:[%s305 + $0x20] sm:$0xff] %v475
        %494 = vst [vmem:[%s305 + $0x28] sm:$0xff] %v478
        %495 = vst [vmem:[%s305 + $0x30] sm:$0xff] %v483
        %496 = vst [vmem:[%s305 + $0x38] sm:$0xff] %v486
        %v497 = vadd.f32 %v459, %v462
        %v498 = vadd.f32 %v497, %v467
        %v499 = vadd.f32 %v498, %v470
        %v500 = vadd.f32 %v499, %v475
        %v501 = vadd.f32 %v500, %v478
        %v502 = vadd.f32 %v501, %v483
        %v503 = vadd.f32 %v502, %v486
        %v504 = vrot.slane %v503, 4
        %v505 = vadd.f32 %v503, %v504
        %v506 = vrot.slane %v505, 2
        %v507 = vadd.f32 %v505, %v506
        %v508 = vrot.slane %v507, 1
        %v509 = vadd.f32 %v507, %v508
        %v510 = vmul.f32 %v459, %v459
        %v511 = vmul.f32 %v462, %v462
        %v512 = vmul.f32 %v467, %v467
        %v513 = vmul.f32 %v470, %v470
        %v514 = vmul.f32 %v475, %v475
        %v515 = vmul.f32 %v478, %v478
        %v516 = vmul.f32 %v483, %v483
        %v517 = vmul.f32 %v486, %v486
        %v518 = vadd.f32 %v510, %v511
        %v519 = vadd.f32 %v518, %v512
        %v520 = vadd.f32 %v519, %v513
        %v521 = vadd.f32 %v520, %v514
        %v522 = vadd.f32 %v521, %v515
        %v523 = vadd.f32 %v522, %v516
        %v524 = vadd.f32 %v523, %v517
        %v525 = vrot.slane %v524, 4
        %v526 = vadd.f32 %v524, %v525
        %v527 = vrot.slane %v526, 2
        %v528 = vadd.f32 %v526, %v527
        %v529 = vrot.slane %v528, 1
        %v530 = vadd.f32 %v528, %v529
        %vm531 = vcmask 1040384
        %v532 = vsel %vm531, %v509, %v530
        %533 = vst [vmem:[%s319] sm:$0x3] %v532
        %v534 = vld [vmem:[#allocation7] sm:$0xf]
        %v535 = vld [vmem:[#allocation7 + $0x4] sm:$0xf]
        %v536 = vld [vmem:[#allocation7 + $0x8] sm:$0xf]
        %v537 = vld [vmem:[#allocation7 + $0xc] sm:$0xf]
        %v538 = vld [vmem:[#allocation7 + $0x10] sm:$0xf]
        %v539 = vld [vmem:[#allocation7 + $0x14] sm:$0xf]
        %v540 = vld [vmem:[#allocation7 + $0x18] sm:$0xf]
        %v541 = vld [vmem:[#allocation7 + $0x1c] sm:$0xf]
        %v542 = vld [vmem:[#allocation7 + $0x20] sm:$0xf]
        %v543 = vld [vmem:[#allocation7 + $0x24] sm:$0xf]
        %v544 = vld [vmem:[#allocation7 + $0x28] sm:$0xf]
        %v545 = vld [vmem:[#allocation7 + $0x2c] sm:$0xf]
        %v546 = vld [vmem:[#allocation7 + $0x30] sm:$0xf]
        %v547 = vld [vmem:[#allocation7 + $0x34] sm:$0xf]
        %v548 = vld [vmem:[#allocation7 + $0x38] sm:$0xf]
        %v549 = vld [vmem:[#allocation7 + $0x3c] sm:$0xf]
        %v566 = vunpack.c.l.b16 %v534
        %v567 = vunpack.c.l.b16 %v535
        %v568 = vunpack.c.l.b16 %v536
        %v569 = vunpack.c.l.b16 %v537
        %v570 = vunpack.c.l.b16 %v538
        %v571 = vunpack.c.l.b16 %v539
        %v572 = vunpack.c.l.b16 %v540
        %v573 = vunpack.c.l.b16 %v541
        %v574 = vunpack.c.l.b16 %v542
        %v575 = vunpack.c.l.b16 %v543
        %v576 = vunpack.c.l.b16 %v544
        %v577 = vunpack.c.l.b16 %v545
        %v578 = vunpack.c.l.b16 %v546
        %v579 = vunpack.c.l.b16 %v547
        %v580 = vunpack.c.l.b16 %v548
        %v581 = vunpack.c.l.b16 %v549
        %v582 = vpack.c.b16 %v567, %v566
        %v583 = vpack.c.b16 %v569, %v568
        %v584 = vpack.c.b16 %v571, %v570
        %v585 = vpack.c.b16 %v573, %v572
        %v586 = vpack.c.b16 %v575, %v574
        %v587 = vpack.c.b16 %v577, %v576
        %v588 = vpack.c.b16 %v579, %v578
        %v589 = vpack.c.b16 %v581, %v580
        %598 = vmatprep.subr.bf16.mxu0 0
        %599 = vmatpush1.bf16.msra.mxu0 %v589
        %600 = vmatprep.subr.bf16.mxu0 0
        %601 = vmatpush1.bf16.msra.mxu0 %v588
        %602 = vmatprep.subr.bf16.mxu0 0
        %603 = vmatpush1.bf16.msra.mxu0 %v587
        %604 = vmatprep.subr.bf16.mxu0 0
        %605 = vmatpush1.bf16.msra.mxu0 %v586
        %606 = vmatprep.subr.bf16.mxu0 0
        %607 = vmatpush1.bf16.msra.mxu0 %v585
        %608 = vmatprep.subr.bf16.mxu0 0
        %609 = vmatpush1.bf16.msra.mxu0 %v584
        %610 = vmatprep.subr.bf16.mxu0 0
        %611 = vmatpush1.bf16.msra.mxu0 %v583
        %612 = vmatprep.subr.bf16.mxu0 0
        %613 = vmatpush1.bf16.msra.mxu0 %v582
        %614 = vmatprep.subr.bf16.mxu0 0
        %615 = vmatpush2.bf16.msra.mxu0 0
        %616 = vmatprep.subr.bf16.mxu0 0
        %617 = vmatpush2.bf16.msra.mxu0 0
        %618 = vmatprep.subr.bf16.mxu0 0
        %619 = vmatpush2.bf16.msra.mxu0 0
        %620 = vmatprep.subr.bf16.mxu0 0
        %621 = vmatpush2.bf16.msra.mxu0 0
        %622 = vmatprep.subr.bf16.mxu0 0
        %623 = vmatpush2.bf16.msra.mxu0 0
        %624 = vmatprep.subr.bf16.mxu0 0
        %625 = vmatpush2.bf16.msra.mxu0 0
        %626 = vmatprep.subr.bf16.mxu0 0
        %627 = vmatpush2.bf16.msra.mxu0 0
        %628 = vmatprep.subr.bf16.mxu0 0
        %629 = vmatpush2.bf16.msra.mxu0 0
        %630 = vmatprep.mubr.bf16.mxu0 0
        %631 = vmatmul.mubr.bf16.gmra.mxu0 %v368
        %v632 = vpop.f32.mrf.mxu0
        %v633 = vadd.f32 0.0, %v632
        %v634 = vpop.f32.mrf.mxu0
        %v635 = vpop.f32.mrf.mxu0
        %v636 = vadd.f32 0.0, %v635
        %v637 = vpop.f32.mrf.mxu0
        %638 = vmatprep.mubr.bf16.mxu0 0
        %639 = vmatmul.mubr.bf16.gmra.mxu0 %v369
        %v640 = vpop.f32.mrf.mxu0
        %v641 = vadd.f32 0.0, %v640
        %v642 = vpop.f32.mrf.mxu0
        %v643 = vpop.f32.mrf.mxu0
        %v644 = vadd.f32 0.0, %v643
        %v645 = vpop.f32.mrf.mxu0
        %646 = vmatprep.mubr.bf16.mxu0 0
        %647 = vmatmul.mubr.bf16.gmra.mxu0 %v370
        %v648 = vpop.f32.mrf.mxu0
        %v649 = vadd.f32 0.0, %v648
        %v650 = vpop.f32.mrf.mxu0
        %v651 = vpop.f32.mrf.mxu0
        %v652 = vadd.f32 0.0, %v651
        %v653 = vpop.f32.mrf.mxu0
        %654 = vmatprep.mubr.bf16.mxu0 0
        %655 = vmatmul.mubr.bf16.gmra.mxu0 %v371
        %v656 = vpop.f32.mrf.mxu0
        %v657 = vadd.f32 0.0, %v656
        %v658 = vpop.f32.mrf.mxu0
        %v659 = vpop.f32.mrf.mxu0
        %v660 = vadd.f32 0.0, %v659
        %v661 = vpop.f32.mrf.mxu0
        %662 = vdwg.mxu0
        %663 = vst [vmem:[%s312] sm:$0xff] %v633
        %664 = vst [vmem:[%s312 + $0x8] sm:$0xff] %v636
        %665 = vst [vmem:[%s312 + $0x10] sm:$0xff] %v641
        %666 = vst [vmem:[%s312 + $0x18] sm:$0xff] %v644
        %667 = vst [vmem:[%s312 + $0x20] sm:$0xff] %v649
        %668 = vst [vmem:[%s312 + $0x28] sm:$0xff] %v652
        %669 = vst [vmem:[%s312 + $0x30] sm:$0xff] %v657
        %670 = vst [vmem:[%s312 + $0x38] sm:$0xff] %v660
        %v671 = vadd.f32 %v633, %v636
        %v672 = vadd.f32 %v671, %v641
        %v673 = vadd.f32 %v672, %v644
        %v674 = vadd.f32 %v673, %v649
        %v675 = vadd.f32 %v674, %v652
        %v676 = vadd.f32 %v675, %v657
        %v677 = vadd.f32 %v676, %v660
        %v678 = vrot.slane %v677, 4
        %v679 = vadd.f32 %v677, %v678
        %v680 = vrot.slane %v679, 2
        %v681 = vadd.f32 %v679, %v680
        %v682 = vrot.slane %v681, 1
        %v683 = vadd.f32 %v681, %v682
        %v684 = vmul.f32 %v633, %v633
        %v685 = vmul.f32 %v636, %v636
        %v686 = vmul.f32 %v641, %v641
        %v687 = vmul.f32 %v644, %v644
        %v688 = vmul.f32 %v649, %v649
        %v689 = vmul.f32 %v652, %v652
        %v690 = vmul.f32 %v657, %v657
        %v691 = vmul.f32 %v660, %v660
        %v692 = vadd.f32 %v684, %v685
        %v693 = vadd.f32 %v692, %v686
        %v694 = vadd.f32 %v693, %v687
        %v695 = vadd.f32 %v694, %v688
        %v696 = vadd.f32 %v695, %v689
        %v697 = vadd.f32 %v696, %v690
        %v698 = vadd.f32 %v697, %v691
        %v699 = vrot.slane %v698, 4
        %v700 = vadd.f32 %v698, %v699
        %v701 = vrot.slane %v700, 2
        %v702 = vadd.f32 %v700, %v701
        %v703 = vrot.slane %v702, 1
        %v704 = vadd.f32 %v702, %v703
        %v705 = vsel %vm531, %v683, %v704
        %706 = vst [vmem:[%s326] sm:$0x3] %v705
        %s707 = sand.u32 %s107, 1
        %s708 = scalar_lea.sflag [#allocation4], %s707
        %s709 = sand.u32 %s107, 1
        %s710 = smul.addr %s709, 64
        %s711 = scalar_lea.vmem [#allocation8], %s710
        %s712 = sand.u32 %s31, 1
        %s713 = scalar_lea.sflag [#allocation10], %s712
        %s714 = sand.u32 %s133, 1
        %s715 = smul.addr %s714, 64
        %s716 = scalar_lea.vmem [#allocation9], %s715
        %s717 = sand.u32 %s31, 1
        %s718 = scalar_lea.sflag [#allocation10], %s717
        %s719 = sand.u32 %s159, 1
        %s720 = smul.addr %s719, 2
        %s721 = scalar_lea.vmem [#allocation11], %s720
        %s722 = sand.u32 %s185, 1
        %s723 = scalar_lea.sflag [#allocation13], %s722
        %s724 = sand.u32 %s185, 1
        %s725 = smul.addr %s724, 2
        %s726 = scalar_lea.vmem [#allocation12], %s725
        // Predicated region
        $region45: #{tpu_custom_call.1} parent=31 // pred_check
          %p727 = pneg %p117
        $region46: #{tpu_custom_call.1} parent=31 // pred_check_branch
          %729 = sbr.rel (%p727) target = $region48
        $region47: #{tpu_custom_call.1} parent=31 // pred_region
          %s731 = ssub.s32 1024, 1024
          %732 = vsyncadd %s708, %s731
          %s733 = smul.addr %s31, 8
          %s734 = smul.addr %s733, 128
          %s735 = scalar_lea.hbm %s3, %s734
          %s736 = sshll.u32 %s711, 4
          %s737 = int_to_ptr.vmem [resolvable:$true] %s736
          %742 = dma.vmem_to_hbm [thread:$0]  %s737, 1024, %s735, %s708, 128, 128, 8
        $region48: #{tpu_custom_call.1} parent=31 // pred_fallthru
          _
        // Predicated region
        $region49: #{tpu_custom_call.1} parent=31 // pred_check
          %p743 = pneg %p143
        $region50: #{tpu_custom_call.1} parent=31 // pred_check_branch
          %745 = sbr.rel (%p743) target = $region52
        $region51: #{tpu_custom_call.1} parent=31 // pred_region
          %s747 = ssub.s32 1024, 1024
          %748 = vsyncadd %s713, %s747
          %s749 = smul.addr %s31, 8
          %s750 = smul.addr %s749, 128
          %s751 = scalar_lea.hbm %s4, %s750
          %s752 = sshll.u32 %s716, 4
          %s753 = int_to_ptr.vmem [resolvable:$true] %s752
          %758 = dma.vmem_to_hbm [thread:$0]  %s753, 1024, %s751, %s713, 128, 128, 8
        $region52: #{tpu_custom_call.1} parent=31 // pred_fallthru
          _
        // Predicated region
        $region53: #{tpu_custom_call.1} parent=31 // pred_check
          %p759 = pneg %p169
        $region54: #{tpu_custom_call.1} parent=31 // pred_check_branch
          %761 = sbr.rel (%p759) target = $region56
        $region55: #{tpu_custom_call.1} parent=31 // pred_region
          %s763 = ssub.s32 32, 32
          %764 = vsyncadd %s718, %s763
          %s765 = smul.addr %s31, 32
          %s766 = scalar_lea.hbm %s5, %s765
          %s768 = sshll.u32 %s721, 4
          %s769 = int_to_ptr.vmem [resolvable:$true] %s768
          %771 = dma.vmem_to_hbm [thread:$0]  %s769, 32, %s766, %s718
        $region56: #{tpu_custom_call.1} parent=31 // pred_fallthru
          _
        // Predicated region
        $region57: #{tpu_custom_call.1} parent=31 // pred_check
          %p772 = pneg %p195
        $region58: #{tpu_custom_call.1} parent=31 // pred_check_branch
          %774 = sbr.rel (%p772) target = $region60
        $region59: #{tpu_custom_call.1} parent=31 // pred_region
          %s776 = ssub.s32 32, 32
          %777 = vsyncadd %s723, %s776
          %s778 = smul.addr %s31, 32
          %s779 = scalar_lea.hbm %s6, %s778
          %s781 = sshll.u32 %s726, 4
          %s782 = int_to_ptr.vmem [resolvable:$true] %s781
          %784 = dma.vmem_to_hbm [thread:$0]  %s782, 32, %s779, %s723
        $region60: #{tpu_custom_call.1} parent=31 // pred_fallthru
          _
      $region32: #{tpu_custom_call.1} parent=5 // pred_fallthru
        _
      %p785 = scmp.le.s32.totalorder 2, %s26
      // Predicated region
      $region61: #{tpu_custom_call.1} parent=5 // pred_check
        %p786 = pneg %p785
      $region62: #{tpu_custom_call.1} parent=5 // pred_check_branch
        %788 = sbr.rel (%p786) target = $region64
      $region63: #{tpu_custom_call.1} parent=5 // pred_region
        %s789 = ssub.s32 %s26, 2
        // Predicated region
        $region65: #{tpu_custom_call.1} parent=63 // pred_check
          %p790 = pneg %p123
        $region66: #{tpu_custom_call.1} parent=63 // pred_check_branch
          %792 = sbr.rel (%p790) target = $region68
        $region67: #{tpu_custom_call.1} parent=63 // pred_region
          %s793 = sand.u32 %s108, 1
          %s794 = scalar_lea.sflag [#allocation4], %s793
          %s795 = sand.u32 %s108, 1
          %s796 = smul.addr %s795, 64
          %s797 = scalar_lea.vmem [#allocation8], %s796
          %798 = dma.done %s794, 1024
        $region68: #{tpu_custom_call.1} parent=63 // pred_fallthru
          _
        // Predicated region
        $region69: #{tpu_custom_call.1} parent=63 // pred_check
          %p799 = pneg %p149
        $region70: #{tpu_custom_call.1} parent=63 // pred_check_branch
          %801 = sbr.rel (%p799) target = $region72
        $region71: #{tpu_custom_call.1} parent=63 // pred_region
          %s802 = sand.u32 %s32, 1
          %s803 = scalar_lea.sflag [#allocation10], %s802
          %s804 = sand.u32 %s134, 1
          %s805 = smul.addr %s804, 64
          %s806 = scalar_lea.vmem [#allocation9], %s805
          %807 = dma.done %s803, 1024
        $region72: #{tpu_custom_call.1} parent=63 // pred_fallthru
          _
        // Predicated region
        $region73: #{tpu_custom_call.1} parent=63 // pred_check
          %p808 = pneg %p175
        $region74: #{tpu_custom_call.1} parent=63 // pred_check_branch
          %810 = sbr.rel (%p808) target = $region76
        $region75: #{tpu_custom_call.1} parent=63 // pred_region
          %s811 = sand.u32 %s32, 1
          %s812 = scalar_lea.sflag [#allocation10], %s811
          %s813 = sand.u32 %s160, 1
          %s814 = smul.addr %s813, 2
          %s815 = scalar_lea.vmem [#allocation11], %s814
          %816 = dma.done %s812, 32
        $region76: #{tpu_custom_call.1} parent=63 // pred_fallthru
          _
        // Predicated region
        $region77: #{tpu_custom_call.1} parent=63 // pred_check
          %p817 = pneg %p201
        $region78: #{tpu_custom_call.1} parent=63 // pred_check_branch
          %819 = sbr.rel (%p817) target = $region80
        $region79: #{tpu_custom_call.1} parent=63 // pred_region
          %s820 = sand.u32 %s186, 1
          %s821 = scalar_lea.sflag [#allocation13], %s820
          %s822 = sand.u32 %s186, 1
          %s823 = smul.addr %s822, 2
          %s824 = scalar_lea.vmem [#allocation12], %s823
          %825 = dma.done %s821, 32
        $region80: #{tpu_custom_call.1} parent=63 // pred_fallthru
          _
      $region64: #{tpu_custom_call.1} parent=5 // pred_fallthru
        _
    $region6: #{tpu_custom_call.1} parent=1 // loop_footer
      %s30 = sadd.s32 1, %s26
    $region7: #{tpu_custom_call.1} parent=1 // loop_footer_branch
      %25 = sbr.rel target = $region3
    $region8: #{tpu_custom_call.1} parent=1 // loop_exit
      _
    %826 = vsyncpa [#allocation3], 1
    %s827 = scalar_lea.sflag [#allocation3], 1
    %828 = vsyncpa %s827, 1
    %829 = vsyncpa [#allocation6], 1
    %830 = vsyncpa [#allocation4], 1
    %s831 = scalar_lea.sflag [#allocation4], 1
    %832 = vsyncpa %s831, 1
    %833 = vsyncpa [#allocation10], 1
    %s834 = scalar_lea.sflag [#allocation10], 1
    %835 = vsyncpa %s834, 1
    %836 = vsyncpa [#allocation13], 1
    %s837 = scalar_lea.sflag [#allocation13], 1
    %838 = vsyncpa %s837, 1

</llo_original>
